<compile_context>
chip_gen: v7x
topology: tpu7x:2x2x1
jax: 0.10.0
libtpu: 0.0.40
codegen_flags: <defaults>
</compile_context>

<pallas_src>
import functools

import numpy as np
import jax
import jax.numpy as jnp
from jax.experimental import pallas as pl
from jax.experimental.pallas import tpu as pltpu

NEG_SLOPE = 0.2  # GATv2Conv default negative_slope


# ----------------------------- Pallas kernels -----------------------------

def lin_l_transposed_kernel(x_ref, wl_ref, bl_ref, o_ref):
    # xlT[hc, j] = sum_f Wl[hc, f] * x[j, f] + bl[hc]
    # Contract over the last dim of both operands ("A @ B^T" MXU pattern) so the
    # lin_l output is produced already transposed (j on lanes) — no XLA transpose.
    o_ref[...] = jax.lax.dot_general(
        wl_ref[...], x_ref[...],
        dimension_numbers=(((1,), (1,)), ((), ())),
        preferred_element_type=jnp.float32) + bl_ref[...]


def gatv2_attn_kernel(att_ref, x_ref, wrT_ref, br_ref, xlT_ref, adj_ref,
                      bias_ref, o_ref, *, heads, ch, relu):
    """Fused GATv2: lin_r projection + attention + aggregation + bias (+ReLU).

    att_ref : (H, C)      SMEM  attention vectors (scalar reads)
    x_ref   : (TI, F)     VMEM  raw node features for this i-tile
    wrT_ref : (F, H*C)    VMEM  lin_r weights (transposed)
    br_ref  : (1, H*C)    VMEM  lin_r bias
    xlT_ref : (H*C, N)    VMEM  lin_l-transformed features, transposed so each
                                channel is a lane-dense row (j on lanes)
    adj_ref : (TI, N)     VMEM  adj[i, j] = 1 iff edge j -> i (incl. self loop)
    bias_ref: (1, H*C)    VMEM  final layer bias
    o_ref   : (TI, H*C)   VMEM  output tile (lane-dense, heads concatenated)
    """
    # lin_r projection fused in-kernel (MXU): xr never round-trips through HBM.
    xr = jnp.dot(x_ref[...], wrT_ref[...],
                 preferred_element_type=jnp.float32) + br_ref[...]      # (TI, H*C)

    # Additive mask: 0 on edges, -1e30 elsewhere (one add per head below).
    neg_bias = jnp.where(adj_ref[...] > 0.0, 0.0, jnp.float32(-1e30))   # (TI, N)

    head_outs = []
    for h in range(heads):                        # static, unrolled
        xlT_h = xlT_ref[h * ch:(h + 1) * ch, :]   # (C, N), j on lanes
        # e[i, j] = sum_c att[h,c] * leaky_relu(x_r[i,h,c] + x_l[j,h,c]),
        # accumulated directly as a (TI, N) tile; no (N, N, C) intermediate.
        e = jnp.zeros(neg_bias.shape, jnp.float32)
        for c in range(ch):                       # static, short, unrolled
            col = h * ch + c
            z = xr[:, col:col + 1] + xlT_h[c:c + 1, :]     # (TI,1)+(1,N) -> (TI,N)
            z = jnp.maximum(z, NEG_SLOPE * z)              # LeakyReLU(0.2)
            e = e + att_ref[h, c] * z
        e = e + neg_bias                                   # mask non-edges
        m = jnp.max(e, axis=1, keepdims=True)              # finite: self-loops present
        p = jnp.exp(e - m)                                 # masked entries underflow to 0
        l = jnp.sum(p, axis=1, keepdims=True)              # >= 1
        alpha = p * pl.reciprocal(l, approx=True)          # EUP, off the VALU path
        # out_h[i, c] = sum_j alpha[i, j] * x_l[j, h, c]   (contract over j / lanes)
        out_h = jax.lax.dot_general(
            alpha, xlT_h, dimension_numbers=(((1,), (1,)), ((), ())),
            preferred_element_type=jnp.float32)            # (TI, C)
        head_outs.append(out_h)

    out = head_outs[0] if heads == 1 else jnp.concatenate(head_outs, axis=1)
    out = out + bias_ref[...]                              # fused layer bias
    if relu:
        out = jnp.maximum(out, 0.0)                        # fused ReLU (layer 1)
    o_ref[...] = out                                       # single lane-dense store


# ------------------------------ wrappers -----------------------------------

def _pick_i_tile(n, target=128):
    if n <= target:
        return n
    for t in range(target, 7, -8):         # largest multiple-of-8 divisor <= target
        if n % t == 0:
            return t
    return n


def pallas_lin_l_transposed(x, wl, bl_col):
    hc, n = wl.shape[0], x.shape[0]
    return pl.pallas_call(
        lin_l_transposed_kernel,
        out_shape=jax.ShapeDtypeStruct((hc, n), jnp.float32),
    )(x, wl, bl_col)


def pallas_gatv2_layer(x, adj, q, heads, ch, relu):
    """One GATv2Conv (concat=True) with lin_r, bias and optional ReLU fused."""
    n, in_f = x.shape
    hc = heads * ch
    xlT = pallas_lin_l_transposed(x, q["wl"], q["bl_col"])          # (H*C, N)
    ti = _pick_i_tile(n)
    kernel = functools.partial(gatv2_attn_kernel, heads=heads, ch=ch, relu=relu)
    return pl.pallas_call(
        kernel,
        out_shape=jax.ShapeDtypeStruct((n, hc), jnp.float32),
        grid=(n // ti,),
        in_specs=[
            pl.BlockSpec(memory_space=pltpu.MemorySpace.SMEM),  # att (H, C), scalars
            pl.BlockSpec((ti, in_f), lambda i: (i, 0)),         # x, i-tiled
            pl.BlockSpec((in_f, hc), lambda i: (0, 0)),         # Wr^T (constant block)
            pl.BlockSpec((1, hc), lambda i: (0, 0)),            # br
            pl.BlockSpec((hc, n), lambda i: (0, 0)),            # xlT, full (j on lanes)
            pl.BlockSpec((ti, n), lambda i: (i, 0)),            # adj rows of this i-tile
            pl.BlockSpec((1, hc), lambda i: (0, 0)),            # layer bias
        ],
        out_specs=pl.BlockSpec((ti, hc), lambda i: (i, 0)),
        compiler_params=pltpu.CompilerParams(
            dimension_semantics=("parallel",),        # shard i-tiles across TCs
            vmem_limit_bytes=32 * 1024 * 1024,        # safe on v5e/v6e/v7x
        ),
    )(q["att"], x, q["wr_T"], q["br_row"], xlT, adj, q["bias_row"])


def gat_forward(x, adj, q1, q2, heads, dim_h, n_classes):
    # dropout(p=0.5) -> identity (eval mode)
    h = pallas_gatv2_layer(x, adj, q1, heads, dim_h, relu=True)      # GATv2 + bias + ReLU
    # dropout(p=0.5) -> identity (eval mode)
    return pallas_gatv2_layer(h, adj, q2, 1, n_classes, relu=False)  # GATv2 + bias


# ------------------------- pure-JAX reference -------------------------------

def gatv2_ref(x, adj, p, heads, C):
    N = x.shape[0]
    xl = (x @ p["wl_T"] + p["bl"]).reshape(N, heads, C)
    xr = (x @ p["wr_T"] + p["br"]).reshape(N, heads, C)
    att = p["att"].reshape(heads, C)
    z = xr[:, None, :, :] + xl[None, :, :, :]                   # (i, j, h, c)
    z = jnp.where(z >= 0, z, NEG_SLOPE * z)
    e = jnp.einsum("ijhc,hc->ijh", z, att)
    mask = (adj > 0)[:, :, None]
    e = jnp.where(mask, e, -1e30)
    w = jnp.where(mask, jnp.exp(e - e.max(axis=1, keepdims=True)), 0.0)
    alpha = w / w.sum(axis=1, keepdims=True)
    out = jnp.einsum("ijh,jhc->ihc", alpha, xl)
    return out.reshape(N, heads * C)


# --------------------------------- main --------------------------------------

if __name__ == "__main__":
    N, n_feats, n_classes, dim_h, heads = 16, 16, 4, 16, 4

    key = jax.random.PRNGKey(0)
    keys = jax.random.split(key, 4)
    x = jax.random.normal(keys[0], (N, n_feats), jnp.float32)

    # deterministic edge_index: bidirectional ring (2, 2N), no self loops, no dups
    src = np.concatenate([np.arange(N), (np.arange(N) + 1) % N])
    dst = np.concatenate([(np.arange(N) + 1) % N, np.arange(N)])
    adj = np.zeros((N, N), np.float32)
    adj[dst, src] = 1.0
    np.fill_diagonal(adj, 1.0)          # add_self_loops=True
    adj = jnp.asarray(adj)

    def init_layer(k, in_f, out_f, h):
        ks = jax.random.split(k, 6)
        s = 0.1
        return {
            "wl_T": s * jax.random.normal(ks[0], (in_f, h * out_f), jnp.float32),
            "bl":   s * jax.random.normal(ks[1], (h * out_f,), jnp.float32),
            "wr_T": s * jax.random.normal(ks[2], (in_f, h * out_f), jnp.float32),
            "br":   s * jax.random.normal(ks[3], (h * out_f,), jnp.float32),
            "att":  s * jax.random.normal(ks[4], (1, h, out_f), jnp.float32),
            "bias": s * jax.random.normal(ks[5], (h * out_f,), jnp.float32),
        }

    def prep_layer(p, h, out_f):
        # kernel-friendly shapes: lin_l weights kept un-transposed (H*C, in) so the
        # projection kernel emits xlT directly; lin_r stays (in, H*C) for x @ Wr^T.
        return {
            "wl":       jnp.transpose(p["wl_T"]),         # (H*C, in)
            "bl_col":   p["bl"].reshape(-1, 1),           # (H*C, 1)
            "wr_T":     p["wr_T"],                        # (in, H*C)
            "br_row":   p["br"].reshape(1, -1),           # (1, H*C)
            "att":      p["att"].reshape(h, out_f),       # (H, C)
            "bias_row": p["bias"].reshape(1, -1),         # (1, H*C)
        }

    p1 = init_layer(keys[1], n_feats, dim_h, heads)
    p2 = init_layer(keys[2], dim_h * heads, n_classes, 1)
    q1 = prep_layer(p1, heads, dim_h)
    q2 = prep_layer(p2, 1, n_classes)

    out = gat_forward(x, adj, q1, q2, heads, dim_h, n_classes)
    out = jax.block_until_ready(out)
    assert out.shape == (N, n_classes)

    # correctness check against pure-JAX reference (tolerance accommodates the
    # EUP approx-reciprocal used for the softmax normalization)
    h_ref = jnp.maximum(gatv2_ref(x, adj, p1, heads, dim_h) + p1["bias"], 0.0)
    out_ref = gatv2_ref(h_ref, adj, p2, 1, n_classes) + p2["bias"]
    np.testing.assert_allclose(np.asarray(out), np.asarray(out_ref),
                               rtol=5e-3, atol=5e-3)

    print("KERNEL_OK")
</pallas_src>

<mosaic_0001>
module attributes {stable_mosaic.version = 11 : i64} {
  func.func @lin_l_transposed_kernel(%arg0: memref<16x16xf32, #tpu.memory_space<vmem>>, %arg1: memref<64x16xf32, #tpu.memory_space<vmem>>, %arg2: memref<64x1xf32, #tpu.memory_space<vmem>>, %arg3: memref<64x16xf32, #tpu.memory_space<vmem>>) attributes {dimension_semantics = [], scalar_prefetch = 0 : i64, scratch_operands = 0 : i64, tpu.core_type = #tpu.core_type<tc>} {
    %c0 = arith.constant 0 : index
    %c0_0 = arith.constant 0 : index
    %0 = vector.load %arg1[%c0, %c0_0] : memref<64x16xf32, #tpu.memory_space<vmem>>, vector<64x16xf32>
    %c0_1 = arith.constant 0 : index
    %c0_2 = arith.constant 0 : index
    %1 = vector.load %arg0[%c0_1, %c0_2] : memref<16x16xf32, #tpu.memory_space<vmem>>, vector<16x16xf32>
    %cst = arith.constant dense<0.000000e+00> : vector<64x16xf32>
    %2 = tpu.matmul %0, %1, %cst {dimension_numbers = #tpu.dot_dimension_numbers<[1], [1], [0], [0], [0, 0, 1, 0], [], []>} : vector<64x16xf32>, vector<16x16xf32>, vector<64x16xf32> -> vector<64x16xf32>
    %c0_3 = arith.constant 0 : index
    %c0_4 = arith.constant 0 : index
    %3 = vector.load %arg2[%c0_3, %c0_4] : memref<64x1xf32, #tpu.memory_space<vmem>>, vector<64x1xf32>
    %4 = vector.broadcast %3 : vector<64x1xf32> to vector<64x16xf32>
    %5 = arith.addf %2, %4 : vector<64x16xf32>
    %c0_5 = arith.constant 0 : index
    %c0_6 = arith.constant 0 : index
    %6 = vector.load %arg3[%c0_5, %c0_6] : memref<64x16xf32, #tpu.memory_space<vmem>>, vector<64x16xf32>
    tpu.vector_store %arg3[%c0_5, %c0_6], %5 {strides = array<i32>} : memref<64x16xf32, #tpu.memory_space<vmem>>, vector<64x16xf32>,
    return
  }
}

</mosaic_0001>

<llo_original>
// kernel: tpu_custom_call.1
$region0: #{tpu_custom_call.1}
  #allocation0 [shape = 'u32[]', space=smem, size = 0x4, offset = 0x4, fixed_abs, tag = 'smem constant byte address 0x4 - core index']
  #allocation1 [shape = 'u32[144,128]{1,0:T(1,128)}', space=vmem, size = 0x12000, scoped, tag = 'internal scratch']
  %s0 = inlined_call_operand.vmem [shape: f32[16,16], index: 0, kind: input, shape index: {}]
  %s1 = inlined_call_operand.vmem [shape: f32[64,16], index: 1, kind: input, shape index: {}]
  %s2 = inlined_call_operand.vmem [shape: f32[64,1], index: 2, kind: input, shape index: {}]
  %s3 = inlined_call_operand.vmem [shape: f32[64,16], index: 3, kind: output, shape index: {}]
  %s4 = sld [smem:[#allocation0]]
  $region22: #{tpu_custom_call.1} parent=0
    _
  %s6 = ssub.s32 1, %s4
  %s7 = scalar_select 0, %s6, %s4
  // Predicated region
  $region2: #{tpu_custom_call.1} parent=0 // pred_check
    _
  $region3: #{tpu_custom_call.1} parent=0 // pred_check_branch
    %9 = sbr.rel (0) target = $region5
  $region4: #{tpu_custom_call.1} parent=0 // pred_region
    _
  $region5: #{tpu_custom_call.1} parent=0 // pred_fallthru
    _
  // Predicated region
  $region6: #{tpu_custom_call.1} parent=0 // pred_check
    _
  $region7: #{tpu_custom_call.1} parent=0 // pred_check_branch
    %11 = sbr.rel (0) target = $region9
  $region8: #{tpu_custom_call.1} parent=0 // pred_region
    _
  $region9: #{tpu_custom_call.1} parent=0 // pred_fallthru
    _
  // Predicated region
  $region10: #{tpu_custom_call.1} parent=0 // pred_check
    _
  $region11: #{tpu_custom_call.1} parent=0 // pred_check_branch
    %13 = sbr.rel (0) target = $region13
  $region12: #{tpu_custom_call.1} parent=0 // pred_region
    _
  $region13: #{tpu_custom_call.1} parent=0 // pred_fallthru
    _
  %v14 = vld [vmem:[%s1] sm:$0xff]
  %v15 = vld [vmem:[%s1 + $0x8] sm:$0xff]
  %v16 = vld [vmem:[%s1 + $0x10] sm:$0xff]
  %v17 = vld [vmem:[%s1 + $0x18] sm:$0xff]
  %v18 = vld [vmem:[%s1 + $0x20] sm:$0xff]
  %v19 = vld [vmem:[%s1 + $0x28] sm:$0xff]
  %v20 = vld [vmem:[%s1 + $0x30] sm:$0xff]
  %v21 = vld [vmem:[%s1 + $0x38] sm:$0xff]
  %v22 = vld [vmem:[%s0] sm:$0xff]
  %v23 = vld [vmem:[%s0 + $0x8] sm:$0xff]
  %v24 = vld [vmem:[%s2] sm:$0xff]
  %v25 = vld [vmem:[%s2 + $0x8] sm:$0xff]
  %v26 = vld [vmem:[%s2 + $0x10] sm:$0xff]
  %v27 = vld [vmem:[%s2 + $0x18] sm:$0xff]
  %v28 = vld [vmem:[%s2 + $0x20] sm:$0xff]
  %v29 = vld [vmem:[%s2 + $0x28] sm:$0xff]
  %v30 = vld [vmem:[%s2 + $0x30] sm:$0xff]
  %v31 = vld [vmem:[%s2 + $0x38] sm:$0xff]
  %33 = vset.pattern.permute.xlu0 0
  %34 = vperm.xlu0 %33, %v24
  %v35 = vpop.permute.xlu0 %34
  %38 = vset.pattern.permute.xlu0 0
  %39 = vperm.xlu0 %38, %v25
  %v40 = vpop.permute.xlu0 %39
  %43 = vset.pattern.permute.xlu0 0
  %44 = vperm.xlu0 %43, %v26
  %v45 = vpop.permute.xlu0 %44
  %48 = vset.pattern.permute.xlu0 0
  %49 = vperm.xlu0 %48, %v27
  %v50 = vpop.permute.xlu0 %49
  %53 = vset.pattern.permute.xlu0 0
  %54 = vperm.xlu0 %53, %v28
  %v55 = vpop.permute.xlu0 %54
  %58 = vset.pattern.permute.xlu0 0
  %59 = vperm.xlu0 %58, %v29
  %v60 = vpop.permute.xlu0 %59
  %63 = vset.pattern.permute.xlu0 0
  %64 = vperm.xlu0 %63, %v30
  %v65 = vpop.permute.xlu0 %64
  %68 = vset.pattern.permute.xlu0 0
  %69 = vperm.xlu0 %68, %v31
  %v70 = vpop.permute.xlu0 %69
  %vm72 = vcmask 130048
  %v74 = vsel %vm72, %v14, 0
  %v77 = vsel %vm72, %v15, 0
  %v80 = vsel %vm72, %v16, 0
  %v83 = vsel %vm72, %v17, 0
  %v86 = vsel %vm72, %v18, 0
  %v89 = vsel %vm72, %v19, 0
  %v92 = vsel %vm72, %v20, 0
  %v95 = vsel %vm72, %v21, 0
  %v98 = vsel %vm72, %v22, 0
  %v101 = vsel %vm72, %v23, 0
  %103 = vmatprep.subr.mxu0 0.0
  %104 = vmatpush1.xpose.msra.mxu0 %v98
  %105 = vmatprep.subr.mxu0 0.0
  %106 = vmatpush1.xpose.msra.mxu0 %v101
  %107 = vmatprep.subr.mxu0 0.0
  %108 = vmatpush1.xpose.msra.mxu0 0.0
  %109 = vmatprep.subr.mxu0 0.0
  %110 = vmatpush1.xpose.msra.mxu0 0.0
  %111 = vmatprep.subr.mxu0 0.0
  %112 = vmatpush1.xpose.msra.mxu0 0.0
  %113 = vmatprep.subr.mxu0 0.0
  %114 = vmatpush1.xpose.msra.mxu0 0.0
  %115 = vmatprep.subr.mxu0 0.0
  %116 = vmatpush1.xpose.msra.mxu0 0.0
  %117 = vmatprep.subr.mxu0 0.0
  %118 = vmatpush1.xpose.msra.mxu0 0.0
  %119 = vmatprep.subr.mxu0 0.0
  %120 = vmatpush1.xpose.msra.mxu0 0.0
  %121 = vmatprep.subr.mxu0 0.0
  %122 = vmatpush1.xpose.msra.mxu0 0.0
  %123 = vmatprep.subr.mxu0 0.0
  %124 = vmatpush1.xpose.msra.mxu0 0.0
  %125 = vmatprep.subr.mxu0 0.0
  %126 = vmatpush1.xpose.msra.mxu0 0.0
  %127 = vmatprep.subr.mxu0 0.0
  %128 = vmatpush1.xpose.msra.mxu0 0.0
  %129 = vmatprep.subr.mxu0 0.0
  %130 = vmatpush1.xpose.msra.mxu0 0.0
  %131 = vmatprep.subr.mxu0 0.0
  %132 = vmatpush1.xpose.msra.mxu0 0.0
  %133 = vmatprep.subr.mxu0 0.0
  %134 = vmatpush1.xpose.msra.mxu0 0.0
  %135 = vmatprep.subr.mxu0 0.0
  %136 = vmatpush1.xpose.msra.mxu0 0.0
  %137 = vmatprep.subr.mxu0 0.0
  %138 = vmatpush1.xpose.msra.mxu0 0.0
  %139 = vmatprep.subr.mxu0 0.0
  %140 = vmatpush1.xpose.msra.mxu0 0.0
  %141 = vmatprep.subr.mxu0 0.0
  %142 = vmatpush1.xpose.msra.mxu0 0.0
  %143 = vmatprep.subr.mxu0 0.0
  %144 = vmatpush1.xpose.msra.mxu0 0.0
  %145 = vmatprep.subr.mxu0 0.0
  %146 = vmatpush1.xpose.msra.mxu0 0.0
  %147 = vmatprep.subr.mxu0 0.0
  %148 = vmatpush1.xpose.msra.mxu0 0.0
  %149 = vmatprep.subr.mxu0 0.0
  %150 = vmatpush1.xpose.msra.mxu0 0.0
  %151 = vmatprep.subr.mxu0 0.0
  %152 = vmatpush1.xpose.msra.mxu0 0.0
  %153 = vmatprep.subr.mxu0 0.0
  %154 = vmatpush1.xpose.msra.mxu0 0.0
  %155 = vmatprep.subr.mxu0 0.0
  %156 = vmatpush1.xpose.msra.mxu0 0.0
  %157 = vmatprep.subr.mxu0 0.0
  %158 = vmatpush1.xpose.msra.mxu0 0.0
  %159 = vmatprep.subr.mxu0 0.0
  %160 = vmatpush1.xpose.msra.mxu0 0.0
  %161 = vmatprep.subr.mxu0 0.0
  %162 = vmatpush1.xpose.msra.mxu0 0.0
  %163 = vmatprep.subr.mxu0 0.0
  %164 = vmatpush1.xpose.msra.mxu0 0.0
  %165 = vmatprep.subr.mxu0 0.0
  %166 = vmatpush1.xpose.msra.mxu0 0.0
  %167 = vmatprep.mubr.f32.mxu0 0.0
  %168 = vmatmul.mubr.f32.gmra.mrb[0].mxu0 %v74
  %v169 = vpop.f32.mrb[0].mxu0
  %v170 = vadd.f32 %v35, %v169
  %v171 = vpop.f32.mrb[0].mxu0
  %172 = vmatprep.mubr.f32.mxu0 0.0
  %173 = vmatmul.mubr.f32.gmra.mrb[0].mxu0 %v77
  %v174 = vpop.f32.mrb[0].mxu0
  %v175 = vadd.f32 %v40, %v174
  %v176 = vpop.f32.mrb[0].mxu0
  %177 = vmatprep.mubr.f32.mxu0 0.0
  %178 = vmatmul.mubr.f32.gmra.mrb[0].mxu0 %v80
  %v179 = vpop.f32.mrb[0].mxu0
  %v180 = vadd.f32 %v45, %v179
  %v181 = vpop.f32.mrb[0].mxu0
  %182 = vmatprep.mubr.f32.mxu0 0.0
  %183 = vmatmul.mubr.f32.gmra.mrb[0].mxu0 %v83
  %v184 = vpop.f32.mrb[0].mxu0
  %v185 = vadd.f32 %v50, %v184
  %v186 = vpop.f32.mrb[0].mxu0
  %187 = vmatprep.mubr.f32.mxu0 0.0
  %188 = vmatmul.mubr.f32.gmra.mrb[0].mxu0 %v86
  %v189 = vpop.f32.mrb[0].mxu0
  %v190 = vadd.f32 %v55, %v189
  %v191 = vpop.f32.mrb[0].mxu0
  %192 = vmatprep.mubr.f32.mxu0 0.0
  %193 = vmatmul.mubr.f32.gmra.mrb[0].mxu0 %v89
  %v194 = vpop.f32.mrb[0].mxu0
  %v195 = vadd.f32 %v60, %v194
  %v196 = vpop.f32.mrb[0].mxu0
  %197 = vmatprep.mubr.f32.mxu0 0.0
  %198 = vmatmul.mubr.f32.gmra.mrb[0].mxu0 %v92
  %v199 = vpop.f32.mrb[0].mxu0
  %v200 = vadd.f32 %v65, %v199
  %v201 = vpop.f32.mrb[0].mxu0
  %202 = vmatprep.mubr.f32.mxu0 0.0
  %203 = vmatmul.mubr.f32.gmra.mrb[0].mxu0 %v95
  %v204 = vpop.f32.mrb[0].mxu0
  %v205 = vadd.f32 %v70, %v204
  %v206 = vpop.f32.mrb[0].mxu0
  %207 = vdwg.mxu0
  %208 = vst.msk [vmem:[%s3] sm:$0xff] %vm72, %v170
  %209 = vst.msk [vmem:[%s3 + $0x8] sm:$0xff] %vm72, %v175
  %210 = vst.msk [vmem:[%s3 + $0x10] sm:$0xff] %vm72, %v180
  %211 = vst.msk [vmem:[%s3 + $0x18] sm:$0xff] %vm72, %v185
  %212 = vst.msk [vmem:[%s3 + $0x20] sm:$0xff] %vm72, %v190
  %213 = vst.msk [vmem:[%s3 + $0x28] sm:$0xff] %vm72, %v195
  %214 = vst.msk [vmem:[%s3 + $0x30] sm:$0xff] %vm72, %v200
  %215 = vst.msk [vmem:[%s3 + $0x38] sm:$0xff] %vm72, %v205
  // Predicated region
  $region14: #{tpu_custom_call.1} parent=0 // pred_check
    _
  $region15: #{tpu_custom_call.1} parent=0 // pred_check_branch
    %217 = sbr.rel (0) target = $region17
  $region16: #{tpu_custom_call.1} parent=0 // pred_region
    _
  $region17: #{tpu_custom_call.1} parent=0 // pred_fallthru
    _
  // Predicated region
  $region18: #{tpu_custom_call.1} parent=0 // pred_check
    _
  $region19: #{tpu_custom_call.1} parent=0 // pred_check_branch
    %219 = sbr.rel (0) target = $region21
  $region20: #{tpu_custom_call.1} parent=0 // pred_region
    _
  $region21: #{tpu_custom_call.1} parent=0 // pred_fallthru
    _

</llo_original>
